<compile_context>
chip_gen: v6e
topology: v6e:2x2x1
jax: 0.10.0
libtpu: 0.0.40
codegen_flags: <defaults>
</compile_context>

<pallas_src>
import jax
import jax.numpy as jnp
from jax.experimental import pallas as pl
from jax.experimental.pallas import tpu as pltpu


def _self_attn_pool_kernel(emb_ref, mask_ref, w_ref, out_ref):
    # emb_ref : (TB, S, H)  embeddings in their HBM dtype (f32 / bf16) -- never upcast
    # mask_ref: (TB, 1, S)  int32 attention mask, lane-dense over S
    # w_ref   : (1, 1, H)   attention projection weight, in emb's dtype
    # out_ref : (TB, 1, H)  pooled sentence embeddings
    tb, _, h = out_ref.shape

    emb = emb_ref[...]                                            # (TB, S, H), native dtype
    w = jnp.broadcast_to(w_ref[...], (tb, 1, h))                  # tiny per-step broadcast

    # scores[b,0,s] = sum_h w[h] * emb[b,s,h].
    # Contraction over both operands' minor (lane) dim == the canonical
    # flash-attention Q.K^T pattern; no relayout of the big emb block and the
    # MXU accumulates in f32 from native-dtype operands.
    scores = jnp.einsum("bqh,bsh->bqs", w, emb,
                        preferred_element_type=jnp.float32)       # (TB, 1, S) f32
    scores = jnp.where(mask_ref[...] == 0, jnp.float32(-1e9), scores)

    # Masked softmax over S (lane axis).  Fully-masked rows degrade to a
    # uniform average over all S positions -- exactly the PyTorch behavior.
    m = jnp.max(scores, axis=-1, keepdims=True)                   # (TB, 1, 1)
    p = jnp.exp(scores - m)                                       # (TB, 1, S)
    denom = jnp.sum(p, axis=-1, keepdims=True)                    # (TB, 1, 1)
    inv = pl.reciprocal(denom, approx=True)                       # EUP slot
    inv = inv * (2.0 - denom * inv)   # one Newton step -> f32-accurate recip
    attn = (p * inv).astype(emb.dtype)                            # back to emb dtype (MXU)

    # pooled[b,0,h] = sum_s attn[b,0,s] * emb[b,s,h]  (natural MXU orientation)
    pooled = jnp.einsum("bqs,bsh->bqh", attn, emb,
                        preferred_element_type=jnp.float32)       # (TB, 1, H) f32
    out_ref[...] = pooled.astype(out_ref.dtype)


def _pick_batch_tile(batch, bytes_per_row, block_budget_bytes):
    """Largest batch tile whose embedding block fits the budget, with >= 2
    grid steps (v7x has two TensorCores) and a strong preference for tiles
    that divide the batch exactly (no ragged remainder block)."""
    tb = max(1, min(batch, block_budget_bytes // max(1, bytes_per_row)))
    if batch > 1:
        tb = min(tb, pl.cdiv(batch, 2))          # keep both v7x TCs busy
    div = next(t for t in range(tb, 0, -1) if batch % t == 0)
    if 2 * div >= tb:                            # accept unless it halves the block
        tb = div
    return tb


def self_attention_pooling(embeddings, attention_mask, weight, bias=None):
    """embeddings [B,S,H] (kept in its HBM dtype), attention_mask [B,S],
    weight [1,H] (nn.Linear layout), bias [1].

    `bias` is accepted for API parity with the PyTorch module but not used:
    softmax is invariant to a constant shift and the -1e9 masked fill
    underflows to zero weight either way, so the result is identical.
    """
    del bias
    B, S, H = embeddings.shape
    dt = embeddings.dtype

    w3 = weight.reshape(1, 1, H).astype(dt)                  # MXU operand in emb dtype
    mask3 = attention_mask.astype(jnp.int32).reshape(B, 1, S)

    # ~16 MiB embedding block per grid step; double-buffered window (~32 MiB)
    # plus tiny scores/mask/out scratch stays under the 48 MiB scoped-VMEM
    # request below on all of v5e / v6e / v7x (v7x: 64 MiB physical).
    EMB_BLOCK_BYTES = 16 * 1024 * 1024
    bytes_per_row = S * H * jnp.dtype(dt).itemsize
    tb = _pick_batch_tile(B, bytes_per_row, EMB_BLOCK_BYTES)
    grid = pl.cdiv(B, tb)
    # No wrapper-side jnp.pad of embeddings: H is left un-padded (full-extent
    # block dims are legal regardless of 128-alignment) and a non-dividing
    # batch tile uses a ragged last block (out-of-bounds reads are per-row
    # garbage in rows whose writes Pallas drops), so we never pay an extra
    # HBM round trip just to tile.

    grid_spec = pltpu.PrefetchScalarGridSpec(
        num_scalar_prefetch=0,
        grid=(grid,),
        in_specs=[
            pl.BlockSpec((tb, S, H), lambda i: (i, 0, 0)),   # embeddings (native dtype)
            pl.BlockSpec((tb, 1, S), lambda i: (i, 0, 0)),   # mask, lane-dense over S
            pl.BlockSpec((1, 1, H), lambda i: (0, 0, 0)),    # shared weight
        ],
        out_specs=pl.BlockSpec((tb, 1, H), lambda i: (i, 0, 0)),
    )

    out = pl.pallas_call(
        _self_attn_pool_kernel,
        out_shape=jax.ShapeDtypeStruct((B, 1, H), dt),
        grid_spec=grid_spec,
        compiler_params=pltpu.CompilerParams(
            dimension_semantics=("parallel",),
            # Above v5e's 16 MiB / v6e's 32 MiB scoped defaults, under v7x's
            # 64 MiB physical VMEM.
            vmem_limit_bytes=48 * 1024 * 1024,
        ),
    )(embeddings, mask3, w3)

    return out.reshape(B, H)


def reference(embeddings, attention_mask, weight, bias):
    # Pure-JAX reference matching the PyTorch forward exactly (incl. bias).
    scores = jnp.einsum("bsh,h->bs", embeddings, weight[0]) + bias[0]
    scores = jnp.where(attention_mask == 0, -1e9, scores)
    attn = jax.nn.softmax(scores, axis=1)
    return jnp.sum(embeddings * attn[..., None], axis=1)


if __name__ == "__main__":
    key = jax.random.PRNGKey(0)
    k_emb, k_w, k_b = jax.random.split(key, 3)

    # Small shapes; B=10 exercises the divisor-based batch tiling (tb=5,
    # grid of 2 steps -> both v7x TCs), H=96 exercises the un-padded-H path.
    B, S, H = 10, 16, 96
    embeddings = jax.random.normal(k_emb, (B, S, H), dtype=jnp.float32)

    # Deterministic mask with varied valid lengths (incl. one fully-masked row).
    lengths = jnp.array([16, 12, 8, 5, 1, 0, 16, 3, 7, 10], dtype=jnp.int32)
    attention_mask = (jnp.arange(S)[None, :] < lengths[:, None]).astype(jnp.int32)

    # nn.Linear(hidden_size, 1): weight (1, H), bias (1,)
    bound = 1.0 / (H ** 0.5)
    weight = jax.random.uniform(k_w, (1, H), minval=-bound, maxval=bound,
                                dtype=jnp.float32)
    bias = jax.random.uniform(k_b, (1,), minval=-bound, maxval=bound,
                              dtype=jnp.float32)

    # f32 path
    out = self_attention_pooling(embeddings, attention_mask, weight, bias)
    out = jax.block_until_ready(out)
    ref = reference(embeddings, attention_mask, weight, bias)
    assert out.shape == (B, H)
    assert bool(jnp.allclose(out, ref, atol=1e-4, rtol=1e-4)), (
        f"f32 mismatch: max abs err {float(jnp.max(jnp.abs(out - ref)))}")

    # bf16 path (exercises the no-upcast MXU path; bf16-appropriate tolerance)
    emb_bf16 = embeddings.astype(jnp.bfloat16)
    out_bf16 = self_attention_pooling(emb_bf16, attention_mask, weight, bias)
    out_bf16 = jax.block_until_ready(out_bf16)
    ref_bf16 = reference(emb_bf16.astype(jnp.float32), attention_mask, weight, bias)
    assert out_bf16.shape == (B, H)
    err = float(jnp.max(jnp.abs(out_bf16.astype(jnp.float32) - ref_bf16)))
    assert bool(jnp.allclose(out_bf16.astype(jnp.float32), ref_bf16,
                             atol=5e-2, rtol=5e-2)), f"bf16 mismatch: max abs err {err}"

    print("KERNEL_OK")
</pallas_src>

<mosaic_0001>
module attributes {stable_mosaic.version = 11 : i64} {
  func.func @_self_attn_pool_kernel(%arg0: i32, %arg1: memref<5x16x96xf32, #tpu.memory_space<vmem>>, %arg2: memref<5x1x16xi32, #tpu.memory_space<vmem>>, %arg3: memref<1x1x96xf32, #tpu.memory_space<vmem>>, %arg4: memref<5x1x96xf32, #tpu.memory_space<vmem>>) attributes {dimension_semantics = [#tpu.dimension_semantics<parallel>], iteration_bounds = array<i64: 2>, scalar_prefetch = 0 : i64, scratch_operands = 0 : i64, tpu.core_type = #tpu.core_type<tc>, window_params = [{transform_indices = @transform_0, window_bounds = array<i64: 5, 16, 96>}, {transform_indices = @transform_1, window_bounds = array<i64: 5, 1, 16>}, {pipeline_mode = #tpu.pipeline_mode<synchronous>, transform_indices = @transform_2, window_bounds = array<i64: 1, 1, 96>}, {transform_indices = @transform_3, window_bounds = array<i64: 5, 1, 96>}]} {
    %c0 = arith.constant 0 : index
    %c0_0 = arith.constant 0 : index
    %c0_1 = arith.constant 0 : index
    %0 = vector.load %arg1[%c0, %c0_0, %c0_1] : memref<5x16x96xf32, #tpu.memory_space<vmem>>, vector<5x16x96xf32>
    %c0_2 = arith.constant 0 : index
    %c0_3 = arith.constant 0 : index
    %c0_4 = arith.constant 0 : index
    %1 = vector.load %arg3[%c0_2, %c0_3, %c0_4] : memref<1x1x96xf32, #tpu.memory_space<vmem>>, vector<1x1x96xf32>
    %2 = vector.shape_cast %1 : vector<1x1x96xf32> to vector<1x1x96xf32>
    %3 = vector.broadcast %2 : vector<1x1x96xf32> to vector<5x1x96xf32>
    "tpu.trace_start"() <{level = 10 : i32, message = "bqh,bsh->bqs"}> : () -> ()
    %cst = arith.constant dense<0.000000e+00> : vector<5x1x16xf32>
    %4 = tpu.matmul %3, %0, %cst {dimension_numbers = #tpu.dot_dimension_numbers<[2], [2], [1], [1], [0, 0, 0, 1, 1, 1], [0], [0]>} : vector<5x1x96xf32>, vector<5x16x96xf32>, vector<5x1x16xf32> -> vector<5x1x16xf32>
    "tpu.trace_stop"() : () -> ()
    %c0_5 = arith.constant 0 : index
    %c0_6 = arith.constant 0 : index
    %c0_7 = arith.constant 0 : index
    %5 = vector.load %arg2[%c0_5, %c0_6, %c0_7] : memref<5x1x16xi32, #tpu.memory_space<vmem>>, vector<5x1x16xi32>
    %c0_i32 = arith.constant 0 : i32
    %6 = vector.broadcast %c0_i32 : i32 to vector<5x1x16xi32>
    %7 = arith.cmpi eq, %5, %6 : vector<5x1x16xi32>
    %cst_8 = arith.constant -1.000000e+09 : f32
    %8 = vector.broadcast %cst_8 : f32 to vector<5x1x16xf32>
    %9 = arith.select %7, %8, %4 : vector<5x1x16xi1>, vector<5x1x16xf32>
    %cst_9 = arith.constant dense<0xFF800000> : vector<5x1xf32>
    %10 = vector.multi_reduction <maximumf>, %9, %cst_9 [2] : vector<5x1x16xf32> to vector<5x1xf32>
    %11 = vector.shape_cast %10 : vector<5x1xf32> to vector<5x1x1xf32>
    %12 = vector.broadcast %11 : vector<5x1x1xf32> to vector<5x1x16xf32>
    %13 = arith.subf %9, %12 : vector<5x1x16xf32>
    %14 = math.exp %13 : vector<5x1x16xf32>
    %cst_10 = arith.constant dense<0.000000e+00> : vector<5x1xf32>
    %15 = vector.multi_reduction <add>, %14, %cst_10 [2] : vector<5x1x16xf32> to vector<5x1xf32>
    %16 = vector.shape_cast %15 : vector<5x1xf32> to vector<5x1x1xf32>
    %17 = tpu.reciprocal %16 {approx = true} : vector<5x1x1xf32> -> vector<5x1x1xf32>
    %18 = arith.mulf %16, %17 : vector<5x1x1xf32>
    %cst_11 = arith.constant 2.000000e+00 : f32
    %19 = vector.broadcast %cst_11 : f32 to vector<5x1x1xf32>
    %20 = arith.subf %19, %18 : vector<5x1x1xf32>
    %21 = arith.mulf %17, %20 : vector<5x1x1xf32>
    %22 = vector.broadcast %21 : vector<5x1x1xf32> to vector<5x1x16xf32>
    %23 = arith.mulf %14, %22 : vector<5x1x16xf32>
    "tpu.trace_start"() <{level = 10 : i32, message = "bqs,bsh->bqh"}> : () -> ()
    %cst_12 = arith.constant dense<0.000000e+00> : vector<5x1x96xf32>
    %24 = tpu.matmul %23, %0, %cst_12 {dimension_numbers = #tpu.dot_dimension_numbers<[2], [1], [1], [2], [0, 0, 0, 1, 1, 2], [0], [0]>} : vector<5x1x16xf32>, vector<5x16x96xf32>, vector<5x1x96xf32> -> vector<5x1x96xf32>
    "tpu.trace_stop"() : () -> ()
    %c0_13 = arith.constant 0 : index
    %c0_14 = arith.constant 0 : index
    %c0_15 = arith.constant 0 : index
    %25 = vector.load %arg4[%c0_13, %c0_14, %c0_15] : memref<5x1x96xf32, #tpu.memory_space<vmem>>, vector<5x1x96xf32>
    tpu.vector_store %arg4[%c0_13, %c0_14, %c0_15], %24 {strides = array<i32>} : memref<5x1x96xf32, #tpu.memory_space<vmem>>, vector<5x1x96xf32>,
    return
  }
  func.func @transform_0(%arg0: i32) -> (i32, i32, i32) {
    %c0_i32 = arith.constant 0 : i32
    %c0_i32_0 = arith.constant 0 : i32
    %c0_i32_1 = arith.constant 0 : i32
    return %arg0, %c0_i32, %c0_i32_0 : i32, i32, i32
  }
  func.func @transform_1(%arg0: i32) -> (i32, i32, i32) {
    %c0_i32 = arith.constant 0 : i32
    %c0_i32_0 = arith.constant 0 : i32
    %c0_i32_1 = arith.constant 0 : i32
    return %arg0, %c0_i32, %c0_i32_0 : i32, i32, i32
  }
  func.func @transform_2(%arg0: i32) -> (i32, i32, i32) {
    %c0_i32 = arith.constant 0 : i32
    %c0_i32_0 = arith.constant 0 : i32
    %c0_i32_1 = arith.constant 0 : i32
    %c0_i32_2 = arith.constant 0 : i32
    return %c0_i32, %c0_i32_0, %c0_i32_1 : i32, i32, i32
  }
  func.func @transform_3(%arg0: i32) -> (i32, i32, i32) {
    %c0_i32 = arith.constant 0 : i32
    %c0_i32_0 = arith.constant 0 : i32
    %c0_i32_1 = arith.constant 0 : i32
    return %arg0, %c0_i32, %c0_i32_0 : i32, i32, i32
  }
}

</mosaic_0001>

<llo_original>
// kernel: tpu_custom_call.1
$region0: #{tpu_custom_call.1}
  #allocation0 [shape = 'u32[]', space=smem, size = 0x4, offset = 0x4, fixed_abs, tag = 'smem constant byte address 0x4 - core index']
  #allocation1 [shape = 'u32[144,128]{1,0:T(1,128)}', space=vmem, size = 0x12000, scoped, tag = 'internal scratch']
  %s0 = inlined_call_operand.hbm [shape: f32[10,16,96], index: 0, kind: input, shape index: {}]
  %s1 = inlined_call_operand.hbm [shape: s32[10,1,16], index: 1, kind: input, shape index: {}]
  %s2 = inlined_call_operand.vmem [shape: f32[1,1,96], index: 2, kind: input, shape index: {}]
  %s3 = inlined_call_operand.hbm [shape: f32[10,1,96], index: 3, kind: output, shape index: {}]
  %s4 = sld [smem:[#allocation0]]
  $region53: #{tpu_custom_call.1} parent=0
    _
  %s6 = ssub.s32 1, %s4
  %s7 = scalar_select 0, %s6, %s4
  $region1: #{tpu_custom_call.1} parent=0
    #allocation2 [shape = 'u8[81920]{0}', space=vmem, size = 0x14000, scoped, tag = 'input window, operand 0']
    #allocation3 [shape = 's32[2]{0}', space=sflag, size = 0x8, scoped, tag = 'scoped memory for tpu_custom_call.1']
    #allocation4 [shape = 's32[2]{0}', space=sflag, size = 0x8, scoped, tag = 'scoped memory for tpu_custom_call.1']
    #allocation5 [shape = 'u8[5120]{0}', space=vmem, size = 0x1400, scoped, tag = 'input window, operand 1']
    #allocation6 [shape = 's32[2]{0}', space=sflag, size = 0x8, scoped, tag = 'scoped memory for tpu_custom_call.1']
    #allocation7 [shape = 'u8[5120]{0}', space=vmem, size = 0x1400, scoped, tag = 'output window, operand 0']
    %8 = vsyncpa [#allocation3], 0
    %s9 = scalar_lea.sflag [#allocation3], 1
    %10 = vsyncpa %s9, 0
    %11 = vsyncpa [#allocation6], 0
    %s12 = scalar_lea.sflag [#allocation6], 1
    %13 = vsyncpa %s12, 0
    %14 = vsyncpa [#allocation4], 0
    %s15 = scalar_lea.sflag [#allocation4], 1
    %16 = vsyncpa %s15, 0
    loop: start=0, step=1, limit=4
    $region2: #{tpu_custom_call.1} parent=1 // loop_pre_header
      _
    $region3: #{tpu_custom_call.1} parent=1 // loop_header
      %s18 = sphi 0, %s22
      %p19 = scmp.ge.s32.totalorder %s18, 4
      %s28 = sphi 0, %s30
      %s31 = sphi 0, %s28
      %s32 = sphi 0, %s31
      %s48 = sphi 0, %s32
      %s54 = sphi 0, %s56
      %s57 = sphi 0, %s54
      %s58 = sphi 0, %s57
      %s74 = sphi 0, %s58
      %s78 = sphi 0, %s78
      %s80 = sphi 0, %s78
      %s81 = sphi 0, %s80
      %s95 = sphi 0, %s81
      %s101 = sphi 0, %s103
      %s104 = sphi 0, %s101
      %s105 = sphi 0, %s104
      %s121 = sphi 0, %s105
    $region4: #{tpu_custom_call.1} parent=1 // loop_header_branch
      %21 = sbr.rel (%p19) target = $region8
    $region5: #{tpu_custom_call.1} parent=1 // loop_body
      %s23 = ssub.s32 %s18, 1
      %s24 = ssub.s32 %s18, 2
      %s25 = sadd.s32 %s18, 1
      %s26 = ssub.s32 %s18, %s25
      %p27 = scmp.eq.s32.totalorder %s26, 0
      %s29 = sadd.s32 %s28, 1
      %s30 = scalar_select %p27, %s28, %s29
      %p33 = pneg %p27
      %p34 = scmp.eq.s32.totalorder %s18, 1
      %p35 = por %p33, %p34
      %p36 = scmp.ne.s32.totalorder %s28, %s31
      %p37 = scmp.eq.s32.totalorder %s18, 0
      %p38 = por %p36, %p37
      %p39 = scmp.ne.s32.totalorder %s28, %s31
      %p40 = scmp.eq.s32.totalorder %s23, 1
      %p41 = por %p39, %p40
      %p42 = scmp.ne.s32.totalorder %s31, %s32
      %p43 = scmp.eq.s32.totalorder %s23, 0
      %p44 = por %p42, %p43
      %p45 = scmp.ne.s32.totalorder %s31, %s32
      %p46 = scmp.eq.s32.totalorder %s24, 1
      %p47 = por %p45, %p46
      %p49 = scmp.ne.s32.totalorder %s32, %s48
      %p50 = scmp.eq.s32.totalorder %s24, 0
      %p51 = por %p49, %p50
      %s52 = ssub.s32 %s18, %s25
      %p53 = scmp.eq.s32.totalorder %s52, 0
      %s55 = sadd.s32 %s54, 1
      %s56 = scalar_select %p53, %s54, %s55
      %p59 = pneg %p53
      %p60 = scmp.eq.s32.totalorder %s18, 1
      %p61 = por %p59, %p60
      %p62 = scmp.ne.s32.totalorder %s54, %s57
      %p63 = scmp.eq.s32.totalorder %s18, 0
      %p64 = por %p62, %p63
      %p65 = scmp.ne.s32.totalorder %s54, %s57
      %p66 = scmp.eq.s32.totalorder %s23, 1
      %p67 = por %p65, %p66
      %p68 = scmp.ne.s32.totalorder %s57, %s58
      %p69 = scmp.eq.s32.totalorder %s23, 0
      %p70 = por %p68, %p69
      %p71 = scmp.ne.s32.totalorder %s57, %s58
      %p72 = scmp.eq.s32.totalorder %s24, 1
      %p73 = por %p71, %p72
      %p75 = scmp.ne.s32.totalorder %s58, %s74
      %p76 = scmp.eq.s32.totalorder %s24, 0
      %p77 = por %p75, %p76
      %s79 = sadd.s32 %s78, 1
      %p82 = scmp.eq.s32.totalorder %s18, 1
      %p83 = scmp.ne.s32.totalorder %s78, %s80
      %p84 = scmp.eq.s32.totalorder %s18, 0
      %p85 = por %p83, %p84
      %p86 = scmp.ne.s32.totalorder %s78, %s80
      %p87 = scmp.eq.s32.totalorder %s23, 1
      %p88 = por %p86, %p87
      %p89 = scmp.ne.s32.totalorder %s80, %s81
      %p90 = scmp.eq.s32.totalorder %s23, 0
      %p91 = por %p89, %p90
      %p92 = scmp.ne.s32.totalorder %s80, %s81
      %p93 = scmp.eq.s32.totalorder %s24, 1
      %p94 = por %p92, %p93
      %p96 = scmp.ne.s32.totalorder %s81, %s95
      %p97 = scmp.eq.s32.totalorder %s24, 0
      %p98 = por %p96, %p97
      %s99 = ssub.s32 %s18, %s25
      %p100 = scmp.eq.s32.totalorder %s99, 0
      %s102 = sadd.s32 %s101, 1
      %s103 = scalar_select %p100, %s101, %s102
      %p106 = pneg %p100
      %p107 = scmp.eq.s32.totalorder %s18, 1
      %p108 = por %p106, %p107
      %p109 = scmp.ne.s32.totalorder %s101, %s104
      %p110 = scmp.eq.s32.totalorder %s18, 0
      %p111 = por %p109, %p110
      %p112 = scmp.ne.s32.totalorder %s101, %s104
      %p113 = scmp.eq.s32.totalorder %s23, 1
      %p114 = por %p112, %p113
      %p115 = scmp.ne.s32.totalorder %s104, %s105
      %p116 = scmp.eq.s32.totalorder %s23, 0
      %p117 = por %p115, %p116
      %p118 = scmp.ne.s32.totalorder %s104, %s105
      %p119 = scmp.eq.s32.totalorder %s24, 1
      %p120 = por %p118, %p119
      %p122 = scmp.ne.s32.totalorder %s105, %s121
      %p123 = scmp.eq.s32.totalorder %s24, 0
      %p124 = por %p122, %p123
      %p125 = scmp.le.s32.totalorder 1, %s18
      %p126 = scmp.lt.s32.totalorder %s18, 3
      %p127 = pnand %p125, %p126
      %p128 = pneg %p127
      // Predicated region
      $region9: #{tpu_custom_call.1} parent=5 // pred_check
        _
      $region10: #{tpu_custom_call.1} parent=5 // pred_check_branch
        %130 = sbr.rel (%p127) target = $region12
      $region11: #{tpu_custom_call.1} parent=5 // pred_region
        %s131 = ssub.s32 %s18, 1
        // Predicated region
        $region13: #{tpu_custom_call.1} parent=11 // pred_check
          %p132 = pneg %p91
        $region14: #{tpu_custom_call.1} parent=11 // pred_check_branch
          %134 = sbr.rel (%p132) target = $region16
        $region15: #{tpu_custom_call.1} parent=11 // pred_region
          _
        $region16: #{tpu_custom_call.1} parent=11 // pred_fallthru
          _
      $region12: #{tpu_custom_call.1} parent=5 // pred_fallthru
        _
      %p135 = scmp.lt.s32.totalorder %s18, 2
      // Predicated region
      $region17: #{tpu_custom_call.1} parent=5 // pred_check
        %p136 = pneg %p135
      $region18: #{tpu_custom_call.1} parent=5 // pred_check_branch
        %138 = sbr.rel (%p136) target = $region20
      $region19: #{tpu_custom_call.1} parent=5 // pred_region
        // Predicated region
        $region21: #{tpu_custom_call.1} parent=19 // pred_check
          %p139 = pneg %p38
        $region22: #{tpu_custom_call.1} parent=19 // pred_check_branch
          %141 = sbr.rel (%p139) target = $region24
        $region23: #{tpu_custom_call.1} parent=19 // pred_region
          %s142 = sand.u32 %s28, 1
          %s143 = scalar_lea.sflag [#allocation3], %s142
          %s144 = sand.u32 %s28, 1
          %s145 = smul.addr %s144, 80
          %s146 = scalar_lea.vmem [#allocation2], %s145
          %s147 = smul.u32 5, %s18
          %s149 = ssub.s32 1280, 1280
          %150 = vsyncadd %s143, %s149
          %s151 = smul.addr %s147, 2
          %s152 = smul.addr %s151, 128
          %s153 = scalar_lea.hbm %s0, %s152
          %s154 = sshll.u32 %s146, 4
          %s155 = int_to_ptr.vmem [resolvable:$true] %s154
          %160 = dma.hbm_to_vmem [thread:$0]  %s153, 1280, %s155, %s143, 128, 128, 8
        $region24: #{tpu_custom_call.1} parent=19 // pred_fallthru
          _
        // Predicated region
        $region25: #{tpu_custom_call.1} parent=19 // pred_check
          %p161 = pneg %p64
        $region26: #{tpu_custom_call.1} parent=19 // pred_check_branch
          %163 = sbr.rel (%p161) target = $region28
        $region27: #{tpu_custom_call.1} parent=19 // pred_region
          %s164 = sand.u32 %s54, 1
          %s165 = scalar_lea.sflag [#allocation6], %s164
          %s166 = sand.u32 %s54, 1
          %s167 = smul.addr %s166, 5
          %s168 = scalar_lea.vmem [#allocation5], %s167
          %s169 = smul.u32 5, %s18
          %s171 = ssub.s32 80, 80
          %172 = vsyncadd %s165, %s171
          %s173 = smul.addr %s169, 16
          %s174 = scalar_lea.hbm %s1, %s173
          %s175 = sshll.u32 %s168, 4
          %s176 = int_to_ptr.vmem [resolvable:$true] %s175
          %181 = dma.hbm_to_vmem [thread:$0]  %s174, 80, %s176, %s165, 16, 16, 1
        $region28: #{tpu_custom_call.1} parent=19 // pred_fallthru
          _
      $region20: #{tpu_custom_call.1} parent=5 // pred_fallthru
        _
      %p182 = scmp.le.s32.totalorder 1, %s18
      %p183 = scmp.lt.s32.totalorder %s18, 3
      %p184 = pnand %p182, %p183
      %p185 = pneg %p184
      // Predicated region
      $region29: #{tpu_custom_call.1} parent=5 // pred_check
        _
      $region30: #{tpu_custom_call.1} parent=5 // pred_check_branch
        %187 = sbr.rel (%p184) target = $region32
      $region31: #{tpu_custom_call.1} parent=5 // pred_region
        %s188 = ssub.s32 %s18, 1
        %s189 = sand.u32 %s31, 1
        %s190 = scalar_lea.sflag [#allocation3], %s189
        %s191 = sand.u32 %s31, 1
        %s192 = smul.addr %s191, 80
        %s193 = scalar_lea.vmem [#allocation2], %s192
        // Predicated region
        $region33: #{tpu_custom_call.1} parent=31 // pred_check
          %p194 = pneg %p44
        $region34: #{tpu_custom_call.1} parent=31 // pred_check_branch
          %196 = sbr.rel (%p194) target = $region36
        $region35: #{tpu_custom_call.1} parent=31 // pred_region
          %197 = dma.done %s190, 1280
        $region36: #{tpu_custom_call.1} parent=31 // pred_fallthru
          _
        %s198 = sand.u32 %s57, 1
        %s199 = scalar_lea.sflag [#allocation6], %s198
        %s200 = sand.u32 %s57, 1
        %s201 = smul.addr %s200, 5
        %s202 = scalar_lea.vmem [#allocation5], %s201
        // Predicated region
        $region37: #{tpu_custom_call.1} parent=31 // pred_check
          %p203 = pneg %p70
        $region38: #{tpu_custom_call.1} parent=31 // pred_check_branch
          %205 = sbr.rel (%p203) target = $region40
        $region39: #{tpu_custom_call.1} parent=31 // pred_region
          %206 = dma.done %s199, 80
        $region40: #{tpu_custom_call.1} parent=31 // pred_fallthru
          _
        %s207 = sand.u32 %s31, 1
        %s208 = scalar_lea.sflag [#allocation3], %s207
        %s209 = sand.u32 %s31, 1
        %s210 = smul.addr %s209, 80
        %s211 = scalar_lea.vmem [#allocation2], %s210
        %p212 = pneg %p44
        %p213 = pneg %p41
        %s214 = sand.u32 %s57, 1
        %s215 = scalar_lea.sflag [#allocation6], %s214
        %s216 = sand.u32 %s57, 1
        %s217 = smul.addr %s216, 5
        %s218 = scalar_lea.vmem [#allocation5], %s217
        %p219 = pneg %p70
        %p220 = pneg %p67
        %p221 = pneg %p91
        %p222 = pneg %p88
        %p223 = pneg %p117
        %p224 = pneg %p114
        %s225 = sand.u32 %s104, 1
        %s226 = scalar_lea.sflag [#allocation4], %s225
        %s227 = sand.u32 %s104, 1
        %s228 = smul.addr %s227, 5
        %s229 = scalar_lea.vmem [#allocation7], %s228
        %s230 = smul.u32 5, %s23
        %s231 = smul.u32 5, %s23
        %s232 = smul.u32 5, %s23
        %v233 = vld [vmem:[%s193] sm:$0xff]
        %v234 = vld [vmem:[%s193 + $0x8] sm:$0xff]
        %v235 = vld [vmem:[%s193 + $0x10] sm:$0xff]
        %v236 = vld [vmem:[%s193 + $0x18] sm:$0xff]
        %v237 = vld [vmem:[%s193 + $0x20] sm:$0xff]
        %v238 = vld [vmem:[%s193 + $0x28] sm:$0xff]
        %v239 = vld [vmem:[%s193 + $0x30] sm:$0xff]
        %v240 = vld [vmem:[%s193 + $0x38] sm:$0xff]
        %v241 = vld [vmem:[%s193 + $0x40] sm:$0xff]
        %v242 = vld [vmem:[%s193 + $0x48] sm:$0xff]
        %v243 = vld [vmem:[%s2] sm:$0x1]
        %vm244 = vcmask 785408
        %v246 = vsel %vm244, %v243, 0
        %v249 = vsel %vm244, %v233, 0
        %v252 = vsel %vm244, %v234, 0
        %254 = vmatprep.subr.mxu0 0.0
        %255 = vmatpush1.xpose.msra.mxu0 0.0
        %256 = vmatprep.subr.mxu0 0.0
        %257 = vmatpush1.xpose.msra.mxu0 0.0
        %258 = vmatprep.subr.mxu0 0.0
        %259 = vmatpush1.xpose.msra.mxu0 0.0
        %260 = vmatprep.subr.mxu0 0.0
        %261 = vmatpush1.xpose.msra.mxu0 0.0
        %262 = vmatprep.subr.mxu0 0.0
        %263 = vmatpush1.xpose.msra.mxu0 0.0
        %264 = vmatprep.subr.mxu0 0.0
        %265 = vmatpush1.xpose.msra.mxu0 0.0
        %266 = vmatprep.subr.mxu0 0.0
        %267 = vmatpush1.xpose.msra.mxu0 0.0
        %268 = vmatprep.subr.mxu0 0.0
        %269 = vmatpush1.xpose.msra.mxu0 0.0
        %270 = vmatprep.subr.mxu0 0.0
        %271 = vmatpush1.xpose.msra.mxu0 0.0
        %272 = vmatprep.subr.mxu0 0.0
        %273 = vmatpush1.xpose.msra.mxu0 0.0
        %274 = vmatprep.subr.mxu0 0.0
        %275 = vmatpush1.xpose.msra.mxu0 0.0
        %276 = vmatprep.subr.mxu0 0.0
        %277 = vmatpush1.xpose.msra.mxu0 0.0
        %278 = vmatprep.subr.mxu0 0.0
        %279 = vmatpush1.xpose.msra.mxu0 0.0
        %280 = vmatprep.subr.mxu0 0.0
        %281 = vmatpush1.xpose.msra.mxu0 0.0
        %282 = vmatprep.subr.mxu0 0.0
        %283 = vmatpush1.xpose.msra.mxu0 %v252
        %284 = vmatprep.subr.mxu0 0.0
        %285 = vmatpush1.xpose.msra.mxu0 %v249
        %286 = vmatprep.subr.mxu0 0.0
        %287 = vmatpush2.xpose.msra.mxu0 0.0
        %288 = vmatprep.subr.mxu0 0.0
        %289 = vmatpush2.xpose.msra.mxu0 0.0
        %290 = vmatprep.subr.mxu0 0.0
        %291 = vmatpush2.xpose.msra.mxu0 0.0
        %292 = vmatprep.subr.mxu0 0.0
        %293 = vmatpush2.xpose.msra.mxu0 0.0
        %294 = vmatprep.subr.mxu0 0.0
        %295 = vmatpush2.xpose.msra.mxu0 0.0
        %296 = vmatprep.subr.mxu0 0.0
        %297 = vmatpush2.xpose.msra.mxu0 0.0
        %298 = vmatprep.subr.mxu0 0.0
        %299 = vmatpush2.xpose.msra.mxu0 0.0
        %300 = vmatprep.subr.mxu0 0.0
        %301 = vmatpush2.xpose.msra.mxu0 0.0
        %302 = vmatprep.subr.mxu0 0.0
        %303 = vmatpush2.xpose.msra.mxu0 0.0
        %304 = vmatprep.subr.mxu0 0.0
        %305 = vmatpush2.xpose.msra.mxu0 0.0
        %306 = vmatprep.subr.mxu0 0.0
        %307 = vmatpush2.xpose.msra.mxu0 0.0
        %308 = vmatprep.subr.mxu0 0.0
        %309 = vmatpush2.xpose.msra.mxu0 0.0
        %310 = vmatprep.subr.mxu0 0.0
        %311 = vmatpush2.xpose.msra.mxu0 0.0
        %312 = vmatprep.subr.mxu0 0.0
        %313 = vmatpush2.xpose.msra.mxu0 0.0
        %314 = vmatprep.subr.mxu0 0.0
        %315 = vmatpush2.xpose.msra.mxu0 0.0
        %316 = vmatprep.subr.mxu0 0.0
        %317 = vmatpush2.xpose.msra.mxu0 0.0
        %318 = vmatprep.mubr.f32.mxu0 0.0
        %319 = vmatmul.mubr.f32.gmra.mxu0 %v246
        %v320 = vpop.f32.mrf.mxu0
        %v321 = vadd.f32 0.0, %v320
        %v322 = vpop.f32.mrf.mxu0
        %323 = vdwg.mxu0
        %v325 = vsel %vm244, %v235, 0
        %v328 = vsel %vm244, %v236, 0
        %330 = vmatprep.subr.mxu0 0.0
        %331 = vmatpush1.xpose.msra.mxu0 0.0
        %332 = vmatprep.subr.mxu0 0.0
        %333 = vmatpush1.xpose.msra.mxu0 0.0
        %334 = vmatprep.subr.mxu0 0.0
        %335 = vmatpush1.xpose.msra.mxu0 0.0
        %336 = vmatprep.subr.mxu0 0.0
        %337 = vmatpush1.xpose.msra.mxu0 0.0
        %338 = vmatprep.subr.mxu0 0.0
        %339 = vmatpush1.xpose.msra.mxu0 0.0
        %340 = vmatprep.subr.mxu0 0.0
        %341 = vmatpush1.xpose.msra.mxu0 0.0
        %342 = vmatprep.subr.mxu0 0.0
        %343 = vmatpush1.xpose.msra.mxu0 0.0
        %344 = vmatprep.subr.mxu0 0.0
        %345 = vmatpush1.xpose.msra.mxu0 0.0
        %346 = vmatprep.subr.mxu0 0.0
        %347 = vmatpush1.xpose.msra.mxu0 0.0
        %348 = vmatprep.subr.mxu0 0.0
        %349 = vmatpush1.xpose.msra.mxu0 0.0
        %350 = vmatprep.subr.mxu0 0.0
        %351 = vmatpush1.xpose.msra.mxu0 0.0
        %352 = vmatprep.subr.mxu0 0.0
        %353 = vmatpush1.xpose.msra.mxu0 0.0
        %354 = vmatprep.subr.mxu0 0.0
        %355 = vmatpush1.xpose.msra.mxu0 0.0
        %356 = vmatprep.subr.mxu0 0.0
        %357 = vmatpush1.xpose.msra.mxu0 0.0
        %358 = vmatprep.subr.mxu0 0.0
        %359 = vmatpush1.xpose.msra.mxu0 %v328
        %360 = vmatprep.subr.mxu0 0.0
        %361 = vmatpush1.xpose.msra.mxu0 %v325
        %362 = vmatprep.subr.mxu0 0.0
        %363 = vmatpush2.xpose.msra.mxu0 0.0
        %364 = vmatprep.subr.mxu0 0.0
        %365 = vmatpush2.xpose.msra.mxu0 0.0
        %366 = vmatprep.subr.mxu0 0.0
        %367 = vmatpush2.xpose.msra.mxu0 0.0
        %368 = vmatprep.subr.mxu0 0.0
        %369 = vmatpush2.xpose.msra.mxu0 0.0
        %370 = vmatprep.subr.mxu0 0.0
        %371 = vmatpush2.xpose.msra.mxu0 0.0
        %372 = vmatprep.subr.mxu0 0.0
        %373 = vmatpush2.xpose.msra.mxu0 0.0
        %374 = vmatprep.subr.mxu0 0.0
        %375 = vmatpush2.xpose.msra.mxu0 0.0
        %376 = vmatprep.subr.mxu0 0.0
        %377 = vmatpush2.xpose.msra.mxu0 0.0
        %378 = vmatprep.subr.mxu0 0.0
        %379 = vmatpush2.xpose.msra.mxu0 0.0
        %380 = vmatprep.subr.mxu0 0.0
        %381 = vmatpush2.xpose.msra.mxu0 0.0
        %382 = vmatprep.subr.mxu0 0.0
        %383 = vmatpush2.xpose.msra.mxu0 0.0
        %384 = vmatprep.subr.mxu0 0.0
        %385 = vmatpush2.xpose.msra.mxu0 0.0
        %386 = vmatprep.subr.mxu0 0.0
        %387 = vmatpush2.xpose.msra.mxu0 0.0
        %388 = vmatprep.subr.mxu0 0.0
        %389 = vmatpush2.xpose.msra.mxu0 0.0
        %390 = vmatprep.subr.mxu0 0.0
        %391 = vmatpush2.xpose.msra.mxu0 0.0
        %392 = vmatprep.subr.mxu0 0.0
        %393 = vmatpush2.xpose.msra.mxu0 0.0
        %394 = vmatprep.mubr.f32.mxu0 0.0
        %395 = vmatmul.mubr.f32.gmra.mxu0 %v246
        %v396 = vpop.f32.mrf.mxu0
        %v397 = vadd.f32 0.0, %v396
        %v398 = vpop.f32.mrf.mxu0
        %399 = vdwg.mxu0
        %v401 = vsel %vm244, %v237, 0
        %v404 = vsel %vm244, %v238, 0
        %406 = vmatprep.subr.mxu0 0.0
        %407 = vmatpush1.xpose.msra.mxu0 0.0
        %408 = vmatprep.subr.mxu0 0.0
        %409 = vmatpush1.xpose.msra.mxu0 0.0
        %410 = vmatprep.subr.mxu0 0.0
        %411 = vmatpush1.xpose.msra.mxu0 0.0
        %412 = vmatprep.subr.mxu0 0.0
        %413 = vmatpush1.xpose.msra.mxu0 0.0
        %414 = vmatprep.subr.mxu0 0.0
        %415 = vmatpush1.xpose.msra.mxu0 0.0
        %416 = vmatprep.subr.mxu0 0.0
        %417 = vmatpush1.xpose.msra.mxu0 0.0
        %418 = vmatprep.subr.mxu0 0.0
        %419 = vmatpush1.xpose.msra.mxu0 0.0
        %420 = vmatprep.subr.mxu0 0.0
        %421 = vmatpush1.xpose.msra.mxu0 0.0
        %422 = vmatprep.subr.mxu0 0.0
        %423 = vmatpush1.xpose.msra.mxu0 0.0
        %424 = vmatprep.subr.mxu0 0.0
        %425 = vmatpush1.xpose.msra.mxu0 0.0
        %426 = vmatprep.subr.mxu0 0.0
        %427 = vmatpush1.xpose.msra.mxu0 0.0
        %428 = vmatprep.subr.mxu0 0.0
        %429 = vmatpush1.xpose.msra.mxu0 0.0
        %430 = vmatprep.subr.mxu0 0.0
        %431 = vmatpush1.xpose.msra.mxu0 0.0
        %432 = vmatprep.subr.mxu0 0.0
        %433 = vmatpush1.xpose.msra.mxu0 0.0
        %434 = vmatprep.subr.mxu0 0.0
        %435 = vmatpush1.xpose.msra.mxu0 %v404
        %436 = vmatprep.subr.mxu0 0.0
        %437 = vmatpush1.xpose.msra.mxu0 %v401
        %438 = vmatprep.subr.mxu0 0.0
        %439 = vmatpush2.xpose.msra.mxu0 0.0
        %440 = vmatprep.subr.mxu0 0.0
        %441 = vmatpush2.xpose.msra.mxu0 0.0
        %442 = vmatprep.subr.mxu0 0.0
        %443 = vmatpush2.xpose.msra.mxu0 0.0
        %444 = vmatprep.subr.mxu0 0.0
        %445 = vmatpush2.xpose.msra.mxu0 0.0
        %446 = vmatprep.subr.mxu0 0.0
        %447 = vmatpush2.xpose.msra.mxu0 0.0
        %448 = vmatprep.subr.mxu0 0.0
        %449 = vmatpush2.xpose.msra.mxu0 0.0
        %450 = vmatprep.subr.mxu0 0.0
        %451 = vmatpush2.xpose.msra.mxu0 0.0
        %452 = vmatprep.subr.mxu0 0.0
        %453 = vmatpush2.xpose.msra.mxu0 0.0
        %454 = vmatprep.subr.mxu0 0.0
        %455 = vmatpush2.xpose.msra.mxu0 0.0
        %456 = vmatprep.subr.mxu0 0.0
        %457 = vmatpush2.xpose.msra.mxu0 0.0
        %458 = vmatprep.subr.mxu0 0.0
        %459 = vmatpush2.xpose.msra.mxu0 0.0
        %460 = vmatprep.subr.mxu0 0.0
        %461 = vmatpush2.xpose.msra.mxu0 0.0
        %462 = vmatprep.subr.mxu0 0.0
        %463 = vmatpush2.xpose.msra.mxu0 0.0
        %464 = vmatprep.subr.mxu0 0.0
        %465 = vmatpush2.xpose.msra.mxu0 0.0
        %466 = vmatprep.subr.mxu0 0.0
        %467 = vmatpush2.xpose.msra.mxu0 0.0
        %468 = vmatprep.subr.mxu0 0.0
        %469 = vmatpush2.xpose.msra.mxu0 0.0
        %470 = vmatprep.mubr.f32.mxu0 0.0
        %471 = vmatmul.mubr.f32.gmra.mxu0 %v246
        %v472 = vpop.f32.mrf.mxu0
        %v473 = vadd.f32 0.0, %v472
        %v474 = vpop.f32.mrf.mxu0
        %475 = vdwg.mxu0
        %v477 = vsel %vm244, %v239, 0
        %v480 = vsel %vm244, %v240, 0
        %482 = vmatprep.subr.mxu0 0.0
        %483 = vmatpush1.xpose.msra.mxu0 0.0
        %484 = vmatprep.subr.mxu0 0.0
        %485 = vmatpush1.xpose.msra.mxu0 0.0
        %486 = vmatprep.subr.mxu0 0.0
        %487 = vmatpush1.xpose.msra.mxu0 0.0
        %488 = vmatprep.subr.mxu0 0.0
        %489 = vmatpush1.xpose.msra.mxu0 0.0
        %490 = vmatprep.subr.mxu0 0.0
        %491 = vmatpush1.xpose.msra.mxu0 0.0
        %492 = vmatprep.subr.mxu0 0.0
        %493 = vmatpush1.xpose.msra.mxu0 0.0
        %494 = vmatprep.subr.mxu0 0.0
        %495 = vmatpush1.xpose.msra.mxu0 0.0
        %496 = vmatprep.subr.mxu0 0.0
        %497 = vmatpush1.xpose.msra.mxu0 0.0
        %498 = vmatprep.subr.mxu0 0.0
        %499 = vmatpush1.xpose.msra.mxu0 0.0
        %500 = vmatprep.subr.mxu0 0.0
        %501 = vmatpush1.xpose.msra.mxu0 0.0
        %502 = vmatprep.subr.mxu0 0.0
        %503 = vmatpush1.xpose.msra.mxu0 0.0
        %504 = vmatprep.subr.mxu0 0.0
        %505 = vmatpush1.xpose.msra.mxu0 0.0
        %506 = vmatprep.subr.mxu0 0.0
        %507 = vmatpush1.xpose.msra.mxu0 0.0
        %508 = vmatprep.subr.mxu0 0.0
        %509 = vmatpush1.xpose.msra.mxu0 0.0
        %510 = vmatprep.subr.mxu0 0.0
        %511 = vmatpush1.xpose.msra.mxu0 %v480
        %512 = vmatprep.subr.mxu0 0.0
        %513 = vmatpush1.xpose.msra.mxu0 %v477
        %514 = vmatprep.subr.mxu0 0.0
        %515 = vmatpush2.xpose.msra.mxu0 0.0
        %516 = vmatprep.subr.mxu0 0.0
        %517 = vmatpush2.xpose.msra.mxu0 0.0
        %518 = vmatprep.subr.mxu0 0.0
        %519 = vmatpush2.xpose.msra.mxu0 0.0
        %520 = vmatprep.subr.mxu0 0.0
        %521 = vmatpush2.xpose.msra.mxu0 0.0
        %522 = vmatprep.subr.mxu0 0.0
        %523 = vmatpush2.xpose.msra.mxu0 0.0
        %524 = vmatprep.subr.mxu0 0.0
        %525 = vmatpush2.xpose.msra.mxu0 0.0
        %526 = vmatprep.subr.mxu0 0.0
        %527 = vmatpush2.xpose.msra.mxu0 0.0
        %528 = vmatprep.subr.mxu0 0.0
        %529 = vmatpush2.xpose.msra.mxu0 0.0
        %530 = vmatprep.subr.mxu0 0.0
        %531 = vmatpush2.xpose.msra.mxu0 0.0
        %532 = vmatprep.subr.mxu0 0.0
        %533 = vmatpush2.xpose.msra.mxu0 0.0
        %534 = vmatprep.subr.mxu0 0.0
        %535 = vmatpush2.xpose.msra.mxu0 0.0
        %536 = vmatprep.subr.mxu0 0.0
        %537 = vmatpush2.xpose.msra.mxu0 0.0
        %538 = vmatprep.subr.mxu0 0.0
        %539 = vmatpush2.xpose.msra.mxu0 0.0
        %540 = vmatprep.subr.mxu0 0.0
        %541 = vmatpush2.xpose.msra.mxu0 0.0
        %542 = vmatprep.subr.mxu0 0.0
        %543 = vmatpush2.xpose.msra.mxu0 0.0
        %544 = vmatprep.subr.mxu0 0.0
        %545 = vmatpush2.xpose.msra.mxu0 0.0
        %546 = vmatprep.mubr.f32.mxu0 0.0
        %547 = vmatmul.mubr.f32.gmra.mxu0 %v246
        %v548 = vpop.f32.mrf.mxu0
        %v549 = vadd.f32 0.0, %v548
        %v550 = vpop.f32.mrf.mxu0
        %551 = vdwg.mxu0
        %v553 = vsel %vm244, %v241, 0
        %v556 = vsel %vm244, %v242, 0
        %558 = vmatprep.subr.mxu0 0.0
        %559 = vmatpush1.xpose.msra.mxu0 0.0
        %560 = vmatprep.subr.mxu0 0.0
        %561 = vmatpush1.xpose.msra.mxu0 0.0
        %562 = vmatprep.subr.mxu0 0.0
        %563 = vmatpush1.xpose.msra.mxu0 0.0
        %564 = vmatprep.subr.mxu0 0.0
        %565 = vmatpush1.xpose.msra.mxu0 0.0
        %566 = vmatprep.subr.mxu0 0.0
        %567 = vmatpush1.xpose.msra.mxu0 0.0
        %568 = vmatprep.subr.mxu0 0.0
        %569 = vmatpush1.xpose.msra.mxu0 0.0
        %570 = vmatprep.subr.mxu0 0.0
        %571 = vmatpush1.xpose.msra.mxu0 0.0
        %572 = vmatprep.subr.mxu0 0.0
        %573 = vmatpush1.xpose.msra.mxu0 0.0
        %574 = vmatprep.subr.mxu0 0.0
        %575 = vmatpush1.xpose.msra.mxu0 0.0
        %576 = vmatprep.subr.mxu0 0.0
        %577 = vmatpush1.xpose.msra.mxu0 0.0
        %578 = vmatprep.subr.mxu0 0.0
        %579 = vmatpush1.xpose.msra.mxu0 0.0
        %580 = vmatprep.subr.mxu0 0.0
        %581 = vmatpush1.xpose.msra.mxu0 0.0
        %582 = vmatprep.subr.mxu0 0.0
        %583 = vmatpush1.xpose.msra.mxu0 0.0
        %584 = vmatprep.subr.mxu0 0.0
        %585 = vmatpush1.xpose.msra.mxu0 0.0
        %586 = vmatprep.subr.mxu0 0.0
        %587 = vmatpush1.xpose.msra.mxu0 %v556
        %588 = vmatprep.subr.mxu0 0.0
        %589 = vmatpush1.xpose.msra.mxu0 %v553
        %590 = vmatprep.subr.mxu0 0.0
        %591 = vmatpush2.xpose.msra.mxu0 0.0
        %592 = vmatprep.subr.mxu0 0.0
        %593 = vmatpush2.xpose.msra.mxu0 0.0
        %594 = vmatprep.subr.mxu0 0.0
        %595 = vmatpush2.xpose.msra.mxu0 0.0
        %596 = vmatprep.subr.mxu0 0.0
        %597 = vmatpush2.xpose.msra.mxu0 0.0
        %598 = vmatprep.subr.mxu0 0.0
        %599 = vmatpush2.xpose.msra.mxu0 0.0
        %600 = vmatprep.subr.mxu0 0.0
        %601 = vmatpush2.xpose.msra.mxu0 0.0
        %602 = vmatprep.subr.mxu0 0.0
        %603 = vmatpush2.xpose.msra.mxu0 0.0
        %604 = vmatprep.subr.mxu0 0.0
        %605 = vmatpush2.xpose.msra.mxu0 0.0
        %606 = vmatprep.subr.mxu0 0.0
        %607 = vmatpush2.xpose.msra.mxu0 0.0
        %608 = vmatprep.subr.mxu0 0.0
        %609 = vmatpush2.xpose.msra.mxu0 0.0
        %610 = vmatprep.subr.mxu0 0.0
        %611 = vmatpush2.xpose.msra.mxu0 0.0
        %612 = vmatprep.subr.mxu0 0.0
        %613 = vmatpush2.xpose.msra.mxu0 0.0
        %614 = vmatprep.subr.mxu0 0.0
        %615 = vmatpush2.xpose.msra.mxu0 0.0
        %616 = vmatprep.subr.mxu0 0.0
        %617 = vmatpush2.xpose.msra.mxu0 0.0
        %618 = vmatprep.subr.mxu0 0.0
        %619 = vmatpush2.xpose.msra.mxu0 0.0
        %620 = vmatprep.subr.mxu0 0.0
        %621 = vmatpush2.xpose.msra.mxu0 0.0
        %622 = vmatprep.mubr.f32.mxu0 0.0
        %623 = vmatmul.mubr.f32.gmra.mxu0 %v246
        %v624 = vpop.f32.mrf.mxu0
        %v625 = vadd.f32 0.0, %v624
        %v626 = vpop.f32.mrf.mxu0
        %627 = vdwg.mxu0
        %v628 = vld [vmem:[%s202] sm:$0x1]
        %v629 = vld [vmem:[%s202 + $0x1] sm:$0x1]
        %v630 = vld [vmem:[%s202 + $0x2] sm:$0x1]
        %v631 = vld [vmem:[%s202 + $0x3] sm:$0x1]
        %v632 = vld [vmem:[%s202 + $0x4] sm:$0x1]
        %vm633 = vcmp.eq.s32.totalorder %v628, 0
        %vm634 = vcmp.eq.s32.totalorder %v629, 0
        %vm635 = vcmp.eq.s32.totalorder %v630, 0
        %vm636 = vcmp.eq.s32.totalorder %v631, 0
        %vm637 = vcmp.eq.s32.totalorder %v632, 0
        %v638 = vsel %vm633, -1e+09, %v321
        %v639 = vsel %vm634, -1e+09, %v397
        %v640 = vsel %vm635, -1e+09, %v473
        %v641 = vsel %vm636, -1e+09, %v549
        %v642 = vsel %vm637, -1e+09, %v625
        %vm643 = vcmask 122880
        %v644 = vsel %vm643, %v638, -inf
        %645 = vmax.xlane.f32.xlu0 %v644
        %v646 = vpop.xlane.xlu0 %645
        %v647 = vsel %vm643, %v639, -inf
        %648 = vmax.xlane.f32.xlu0 %v647
        %v649 = vpop.xlane.xlu0 %648
        %v650 = vsel %vm643, %v640, -inf
        %651 = vmax.xlane.f32.xlu0 %v650
        %v652 = vpop.xlane.xlu0 %651
        %v653 = vsel %vm643, %v641, -inf
        %654 = vmax.xlane.f32.xlu0 %v653
        %v655 = vpop.xlane.xlu0 %654
        %v656 = vsel %vm643, %v642, -inf
        %657 = vmax.xlane.f32.xlu0 %v656
        %v658 = vpop.xlane.xlu0 %657
        %v659 = vsub.f32 %v638, %v646
        %v660 = vsub.f32 %v639, %v649
        %v661 = vsub.f32 %v640, %v652
        %v662 = vsub.f32 %v641, %v655
        %v663 = vsub.f32 %v642, %v658
        %v664 = vmul.f32 %v659, 1.442695
        %v665 = vpow.pop %v664
        %v666 = vmul.f32 %v660, 1.442695
        %v667 = vpow.pop %v666
        %v668 = vmul.f32 %v661, 1.442695
        %v669 = vpow.pop %v668
        %v670 = vmul.f32 %v662, 1.442695
        %v671 = vpow.pop %v670
        %v672 = vmul.f32 %v663, 1.442695
        %v673 = vpow.pop %v672
        %v674 = vsel %vm643, %v665, 0.0
        %675 = vadd.xlane.f32.xlu0 %v674
        %v676 = vpop.xlane.xlu0 %675
        %v677 = vsel %vm643, %v667, 0.0
        %678 = vadd.xlane.f32.xlu0 %v677
        %v679 = vpop.xlane.xlu0 %678
        %v680 = vsel %vm643, %v669, 0.0
        %681 = vadd.xlane.f32.xlu0 %v680
        %v682 = vpop.xlane.xlu0 %681
        %v683 = vsel %vm643, %v671, 0.0
        %684 = vadd.xlane.f32.xlu0 %v683
        %v685 = vpop.xlane.xlu0 %684
        %v686 = vsel %vm643, %v673, 0.0
        %687 = vadd.xlane.f32.xlu0 %v686
        %v688 = vpop.xlane.xlu0 %687
        %v689 = vrcp.pop %v676
        %v690 = vrcp.pop %v679
        %v691 = vrcp.pop %v682
        %v692 = vrcp.pop %v685
        %v693 = vrcp.pop %v688
        %v694 = vmul.f32 %v676, %v689
        %v695 = vmul.f32 %v679, %v690
        %v696 = vmul.f32 %v682, %v691
        %v697 = vmul.f32 %v685, %v692
        %v698 = vmul.f32 %v688, %v693
        %v699 = vsub.f32 2.0, %v694
        %v700 = vsub.f32 2.0, %v695
        %v701 = vsub.f32 2.0, %v696
        %v702 = vsub.f32 2.0, %v697
        %v703 = vsub.f32 2.0, %v698
        %v704 = vmul.f32 %v689, %v699
        %v705 = vmul.f32 %v690, %v700
        %v706 = vmul.f32 %v691, %v701
        %v707 = vmul.f32 %v692, %v702
        %v708 = vmul.f32 %v693, %v703
        %v709 = vmul.f32 %v665, %v704
        %v710 = vmul.f32 %v667, %v705
        %v711 = vmul.f32 %v669, %v706
        %v712 = vmul.f32 %v671, %v707
        %v713 = vmul.f32 %v673, %v708
        %vm714 = vcmask 130048
        %v716 = vsel %vm714, %v709, 0
        %718 = vmatprep.subr.mxu0 0.0
        %719 = vmatpush1.msra.mxu0 0.0
        %720 = vmatprep.subr.mxu0 0.0
        %721 = vmatpush1.msra.mxu0 0.0
        %722 = vmatprep.subr.mxu0 0.0
        %723 = vmatpush1.msra.mxu0 0.0
        %724 = vmatprep.subr.mxu0 0.0
        %725 = vmatpush1.msra.mxu0 0.0
        %726 = vmatprep.subr.mxu0 0.0
        %727 = vmatpush1.msra.mxu0 0.0
        %728 = vmatprep.subr.mxu0 0.0
        %729 = vmatpush1.msra.mxu0 0.0
        %730 = vmatprep.subr.mxu0 0.0
        %731 = vmatpush1.msra.mxu0 0.0
        %732 = vmatprep.subr.mxu0 0.0
        %733 = vmatpush1.msra.mxu0 0.0
        %734 = vmatprep.subr.mxu0 0.0
        %735 = vmatpush1.msra.mxu0 0.0
        %736 = vmatprep.subr.mxu0 0.0
        %737 = vmatpush1.msra.mxu0 0.0
        %738 = vmatprep.subr.mxu0 0.0
        %739 = vmatpush1.msra.mxu0 0.0
        %740 = vmatprep.subr.mxu0 0.0
        %741 = vmatpush1.msra.mxu0 0.0
        %742 = vmatprep.subr.mxu0 0.0
        %743 = vmatpush1.msra.mxu0 0.0
        %744 = vmatprep.subr.mxu0 0.0
        %745 = vmatpush1.msra.mxu0 0.0
        %746 = vmatprep.subr.mxu0 0.0
        %747 = vmatpush1.msra.mxu0 %v234
        %748 = vmatprep.subr.mxu0 0.0
        %749 = vmatpush1.msra.mxu0 %v233
        %750 = vmatprep.subr.mxu0 0.0
        %751 = vmatpush2.msra.mxu0 0.0
        %752 = vmatprep.subr.mxu0 0.0
        %753 = vmatpush2.msra.mxu0 0.0
        %754 = vmatprep.subr.mxu0 0.0
        %755 = vmatpush2.msra.mxu0 0.0
        %756 = vmatprep.subr.mxu0 0.0
        %757 = vmatpush2.msra.mxu0 0.0
        %758 = vmatprep.subr.mxu0 0.0
        %759 = vmatpush2.msra.mxu0 0.0
        %760 = vmatprep.subr.mxu0 0.0
        %761 = vmatpush2.msra.mxu0 0.0
        %762 = vmatprep.subr.mxu0 0.0
        %763 = vmatpush2.msra.mxu0 0.0
        %764 = vmatprep.subr.mxu0 0.0
        %765 = vmatpush2.msra.mxu0 0.0
        %766 = vmatprep.subr.mxu0 0.0
        %767 = vmatpush2.msra.mxu0 0.0
        %768 = vmatprep.subr.mxu0 0.0
        %769 = vmatpush2.msra.mxu0 0.0
        %770 = vmatprep.subr.mxu0 0.0
        %771 = vmatpush2.msra.mxu0 0.0
        %772 = vmatprep.subr.mxu0 0.0
        %773 = vmatpush2.msra.mxu0 0.0
        %774 = vmatprep.subr.mxu0 0.0
        %775 = vmatpush2.msra.mxu0 0.0
        %776 = vmatprep.subr.mxu0 0.0
        %777 = vmatpush2.msra.mxu0 0.0
        %778 = vmatprep.subr.mxu0 0.0
        %779 = vmatpush2.msra.mxu0 0.0
        %780 = vmatprep.subr.mxu0 0.0
        %781 = vmatpush2.msra.mxu0 0.0
        %782 = vmatprep.mubr.f32.mxu0 0.0
        %783 = vmatmul.mubr.f32.gmra.mxu0 %v716
        %v784 = vpop.f32.mrf.mxu0
        %v785 = vadd.f32 0.0, %v784
        %v786 = vpop.f32.mrf.mxu0
        %787 = vdwg.mxu0
        %v789 = vsel %vm714, %v710, 0
        %791 = vmatprep.subr.mxu0 0.0
        %792 = vmatpush1.msra.mxu0 0.0
        %793 = vmatprep.subr.mxu0 0.0
        %794 = vmatpush1.msra.mxu0 0.0
        %795 = vmatprep.subr.mxu0 0.0
        %796 = vmatpush1.msra.mxu0 0.0
        %797 = vmatprep.subr.mxu0 0.0
        %798 = vmatpush1.msra.mxu0 0.0
        %799 = vmatprep.subr.mxu0 0.0
        %800 = vmatpush1.msra.mxu0 0.0
        %801 = vmatprep.subr.mxu0 0.0
        %802 = vmatpush1.msra.mxu0 0.0
        %803 = vmatprep.subr.mxu0 0.0
        %804 = vmatpush1.msra.mxu0 0.0
        %805 = vmatprep.subr.mxu0 0.0
        %806 = vmatpush1.msra.mxu0 0.0
        %807 = vmatprep.subr.mxu0 0.0
        %808 = vmatpush1.msra.mxu0 0.0
        %809 = vmatprep.subr.mxu0 0.0
        %810 = vmatpush1.msra.mxu0 0.0
        %811 = vmatprep.subr.mxu0 0.0
        %812 = vmatpush1.msra.mxu0 0.0
        %813 = vmatprep.subr.mxu0 0.0
        %814 = vmatpush1.msra.mxu0 0.0
        %815 = vmatprep.subr.mxu0 0.0
        %816 = vmatpush1.msra.mxu0 0.0
        %817 = vmatprep.subr.mxu0 0.0
        %818 = vmatpush1.msra.mxu0 0.0
        %819 = vmatprep.subr.mxu0 0.0
        %820 = vmatpush1.msra.mxu0 %v236
        %821 = vmatprep.subr.mxu0 0.0
        %822 = vmatpush1.msra.mxu0 %v235
        %823 = vmatprep.subr.mxu0 0.0
        %824 = vmatpush2.msra.mxu0 0.0
        %825 = vmatprep.subr.mxu0 0.0
        %826 = vmatpush2.msra.mxu0 0.0
        %827 = vmatprep.subr.mxu0 0.0
        %828 = vmatpush2.msra.mxu0 0.0
        %829 = vmatprep.subr.mxu0 0.0
        %830 = vmatpush2.msra.mxu0 0.0
        %831 = vmatprep.subr.mxu0 0.0
        %832 = vmatpush2.msra.mxu0 0.0
        %833 = vmatprep.subr.mxu0 0.0
        %834 = vmatpush2.msra.mxu0 0.0
        %835 = vmatprep.subr.mxu0 0.0
        %836 = vmatpush2.msra.mxu0 0.0
        %837 = vmatprep.subr.mxu0 0.0
        %838 = vmatpush2.msra.mxu0 0.0
        %839 = vmatprep.subr.mxu0 0.0
        %840 = vmatpush2.msra.mxu0 0.0
        %841 = vmatprep.subr.mxu0 0.0
        %842 = vmatpush2.msra.mxu0 0.0
        %843 = vmatprep.subr.mxu0 0.0
        %844 = vmatpush2.msra.mxu0 0.0
        %845 = vmatprep.subr.mxu0 0.0
        %846 = vmatpush2.msra.mxu0 0.0
        %847 = vmatprep.subr.mxu0 0.0
        %848 = vmatpush2.msra.mxu0 0.0
        %849 = vmatprep.subr.mxu0 0.0
        %850 = vmatpush2.msra.mxu0 0.0
        %851 = vmatprep.subr.mxu0 0.0
        %852 = vmatpush2.msra.mxu0 0.0
        %853 = vmatprep.subr.mxu0 0.0
        %854 = vmatpush2.msra.mxu0 0.0
        %855 = vmatprep.mubr.f32.mxu0 0.0
        %856 = vmatmul.mubr.f32.gmra.mxu0 %v789
        %v857 = vpop.f32.mrf.mxu0
        %v858 = vadd.f32 0.0, %v857
        %v859 = vpop.f32.mrf.mxu0
        %860 = vdwg.mxu0
        %v862 = vsel %vm714, %v711, 0
        %864 = vmatprep.subr.mxu0 0.0
        %865 = vmatpush1.msra.mxu0 0.0
        %866 = vmatprep.subr.mxu0 0.0
        %867 = vmatpush1.msra.mxu0 0.0
        %868 = vmatprep.subr.mxu0 0.0
        %869 = vmatpush1.msra.mxu0 0.0
        %870 = vmatprep.subr.mxu0 0.0
        %871 = vmatpush1.msra.mxu0 0.0
        %872 = vmatprep.subr.mxu0 0.0
        %873 = vmatpush1.msra.mxu0 0.0
        %874 = vmatprep.subr.mxu0 0.0
        %875 = vmatpush1.msra.mxu0 0.0
        %876 = vmatprep.subr.mxu0 0.0
        %877 = vmatpush1.msra.mxu0 0.0
        %878 = vmatprep.subr.mxu0 0.0
        %879 = vmatpush1.msra.mxu0 0.0
        %880 = vmatprep.subr.mxu0 0.0
        %881 = vmatpush1.msra.mxu0 0.0
        %882 = vmatprep.subr.mxu0 0.0
        %883 = vmatpush1.msra.mxu0 0.0
        %884 = vmatprep.subr.mxu0 0.0
        %885 = vmatpush1.msra.mxu0 0.0
        %886 = vmatprep.subr.mxu0 0.0
        %887 = vmatpush1.msra.mxu0 0.0
        %888 = vmatprep.subr.mxu0 0.0
        %889 = vmatpush1.msra.mxu0 0.0
        %890 = vmatprep.subr.mxu0 0.0
        %891 = vmatpush1.msra.mxu0 0.0
        %892 = vmatprep.subr.mxu0 0.0
        %893 = vmatpush1.msra.mxu0 %v238
        %894 = vmatprep.subr.mxu0 0.0
        %895 = vmatpush1.msra.mxu0 %v237
        %896 = vmatprep.subr.mxu0 0.0
        %897 = vmatpush2.msra.mxu0 0.0
        %898 = vmatprep.subr.mxu0 0.0
        %899 = vmatpush2.msra.mxu0 0.0
        %900 = vmatprep.subr.mxu0 0.0
        %901 = vmatpush2.msra.mxu0 0.0
        %902 = vmatprep.subr.mxu0 0.0
        %903 = vmatpush2.msra.mxu0 0.0
        %904 = vmatprep.subr.mxu0 0.0
        %905 = vmatpush2.msra.mxu0 0.0
        %906 = vmatprep.subr.mxu0 0.0
        %907 = vmatpush2.msra.mxu0 0.0
        %908 = vmatprep.subr.mxu0 0.0
        %909 = vmatpush2.msra.mxu0 0.0
        %910 = vmatprep.subr.mxu0 0.0
        %911 = vmatpush2.msra.mxu0 0.0
        %912 = vmatprep.subr.mxu0 0.0
        %913 = vmatpush2.msra.mxu0 0.0
        %914 = vmatprep.subr.mxu0 0.0
        %915 = vmatpush2.msra.mxu0 0.0
        %916 = vmatprep.subr.mxu0 0.0
        %917 = vmatpush2.msra.mxu0 0.0
        %918 = vmatprep.subr.mxu0 0.0
        %919 = vmatpush2.msra.mxu0 0.0
        %920 = vmatprep.subr.mxu0 0.0
        %921 = vmatpush2.msra.mxu0 0.0
        %922 = vmatprep.subr.mxu0 0.0
        %923 = vmatpush2.msra.mxu0 0.0
        %924 = vmatprep.subr.mxu0 0.0
        %925 = vmatpush2.msra.mxu0 0.0
        %926 = vmatprep.subr.mxu0 0.0
        %927 = vmatpush2.msra.mxu0 0.0
        %928 = vmatprep.mubr.f32.mxu0 0.0
        %929 = vmatmul.mubr.f32.gmra.mxu0 %v862
        %v930 = vpop.f32.mrf.mxu0
        %v931 = vadd.f32 0.0, %v930
        %v932 = vpop.f32.mrf.mxu0
        %933 = vdwg.mxu0
        %v935 = vsel %vm714, %v712, 0
        %937 = vmatprep.subr.mxu0 0.0
        %938 = vmatpush1.msra.mxu0 0.0
        %939 = vmatprep.subr.mxu0 0.0
        %940 = vmatpush1.msra.mxu0 0.0
        %941 = vmatprep.subr.mxu0 0.0
        %942 = vmatpush1.msra.mxu0 0.0
        %943 = vmatprep.subr.mxu0 0.0
        %944 = vmatpush1.msra.mxu0 0.0
        %945 = vmatprep.subr.mxu0 0.0
        %946 = vmatpush1.msra.mxu0 0.0
        %947 = vmatprep.subr.mxu0 0.0
        %948 = vmatpush1.msra.mxu0 0.0
        %949 = vmatprep.subr.mxu0 0.0
        %950 = vmatpush1.msra.mxu0 0.0
        %951 = vmatprep.subr.mxu0 0.0
        %952 = vmatpush1.msra.mxu0 0.0
        %953 = vmatprep.subr.mxu0 0.0
        %954 = vmatpush1.msra.mxu0 0.0
        %955 = vmatprep.subr.mxu0 0.0
        %956 = vmatpush1.msra.mxu0 0.0
        %957 = vmatprep.subr.mxu0 0.0
        %958 = vmatpush1.msra.mxu0 0.0
        %959 = vmatprep.subr.mxu0 0.0
        %960 = vmatpush1.msra.mxu0 0.0
        %961 = vmatprep.subr.mxu0 0.0
        %962 = vmatpush1.msra.mxu0 0.0
        %963 = vmatprep.subr.mxu0 0.0
        %964 = vmatpush1.msra.mxu0 0.0
        %965 = vmatprep.subr.mxu0 0.0
        %966 = vmatpush1.msra.mxu0 %v240
        %967 = vmatprep.subr.mxu0 0.0
        %968 = vmatpush1.msra.mxu0 %v239
        %969 = vmatprep.subr.mxu0 0.0
        %970 = vmatpush2.msra.mxu0 0.0
        %971 = vmatprep.subr.mxu0 0.0
        %972 = vmatpush2.msra.mxu0 0.0
        %973 = vmatprep.subr.mxu0 0.0
        %974 = vmatpush2.msra.mxu0 0.0
        %975 = vmatprep.subr.mxu0 0.0
        %976 = vmatpush2.msra.mxu0 0.0
        %977 = vmatprep.subr.mxu0 0.0
        %978 = vmatpush2.msra.mxu0 0.0
        %979 = vmatprep.subr.mxu0 0.0
        %980 = vmatpush2.msra.mxu0 0.0
        %981 = vmatprep.subr.mxu0 0.0
        %982 = vmatpush2.msra.mxu0 0.0
        %983 = vmatprep.subr.mxu0 0.0
        %984 = vmatpush2.msra.mxu0 0.0
        %985 = vmatprep.subr.mxu0 0.0
        %986 = vmatpush2.msra.mxu0 0.0
        %987 = vmatprep.subr.mxu0 0.0
        %988 = vmatpush2.msra.mxu0 0.0
        %989 = vmatprep.subr.mxu0 0.0
        %990 = vmatpush2.msra.mxu0 0.0
        %991 = vmatprep.subr.mxu0 0.0
        %992 = vmatpush2.msra.mxu0 0.0
        %993 = vmatprep.subr.mxu0 0.0
        %994 = vmatpush2.msra.mxu0 0.0
        %995 = vmatprep.subr.mxu0 0.0
        %996 = vmatpush2.msra.mxu0 0.0
        %997 = vmatprep.subr.mxu0 0.0
        %998 = vmatpush2.msra.mxu0 0.0
        %999 = vmatprep.subr.mxu0 0.0
        %1000 = vmatpush2.msra.mxu0 0.0
        %1001 = vmatprep.mubr.f32.mxu0 0.0
        %1002 = vmatmul.mubr.f32.gmra.mxu0 %v935
        %v1003 = vpop.f32.mrf.mxu0
        %v1004 = vadd.f32 0.0, %v1003
        %v1005 = vpop.f32.mrf.mxu0
        %1006 = vdwg.mxu0
        %v1008 = vsel %vm714, %v713, 0
        %1010 = vmatprep.subr.mxu0 0.0
        %1011 = vmatpush1.msra.mxu0 0.0
        %1012 = vmatprep.subr.mxu0 0.0
        %1013 = vmatpush1.msra.mxu0 0.0
        %1014 = vmatprep.subr.mxu0 0.0
        %1015 = vmatpush1.msra.mxu0 0.0
        %1016 = vmatprep.subr.mxu0 0.0
        %1017 = vmatpush1.msra.mxu0 0.0
        %1018 = vmatprep.subr.mxu0 0.0
        %1019 = vmatpush1.msra.mxu0 0.0
        %1020 = vmatprep.subr.mxu0 0.0
        %1021 = vmatpush1.msra.mxu0 0.0
        %1022 = vmatprep.subr.mxu0 0.0
        %1023 = vmatpush1.msra.mxu0 0.0
        %1024 = vmatprep.subr.mxu0 0.0
        %1025 = vmatpush1.msra.mxu0 0.0
        %1026 = vmatprep.subr.mxu0 0.0
        %1027 = vmatpush1.msra.mxu0 0.0
        %1028 = vmatprep.subr.mxu0 0.0
        %1029 = vmatpush1.msra.mxu0 0.0
        %1030 = vmatprep.subr.mxu0 0.0
        %1031 = vmatpush1.msra.mxu0 0.0
        %1032 = vmatprep.subr.mxu0 0.0
        %1033 = vmatpush1.msra.mxu0 0.0
        %1034 = vmatprep.subr.mxu0 0.0
        %1035 = vmatpush1.msra.mxu0 0.0
        %1036 = vmatprep.subr.mxu0 0.0
        %1037 = vmatpush1.msra.mxu0 0.0
        %1038 = vmatprep.subr.mxu0 0.0
        %1039 = vmatpush1.msra.mxu0 %v242
        %1040 = vmatprep.subr.mxu0 0.0
        %1041 = vmatpush1.msra.mxu0 %v241
        %1042 = vmatprep.subr.mxu0 0.0
        %1043 = vmatpush2.msra.mxu0 0.0
        %1044 = vmatprep.subr.mxu0 0.0
        %1045 = vmatpush2.msra.mxu0 0.0
        %1046 = vmatprep.subr.mxu0 0.0
        %1047 = vmatpush2.msra.mxu0 0.0
        %1048 = vmatprep.subr.mxu0 0.0
        %1049 = vmatpush2.msra.mxu0 0.0
        %1050 = vmatprep.subr.mxu0 0.0
        %1051 = vmatpush2.msra.mxu0 0.0
        %1052 = vmatprep.subr.mxu0 0.0
        %1053 = vmatpush2.msra.mxu0 0.0
        %1054 = vmatprep.subr.mxu0 0.0
        %1055 = vmatpush2.msra.mxu0 0.0
        %1056 = vmatprep.subr.mxu0 0.0
        %1057 = vmatpush2.msra.mxu0 0.0
        %1058 = vmatprep.subr.mxu0 0.0
        %1059 = vmatpush2.msra.mxu0 0.0
        %1060 = vmatprep.subr.mxu0 0.0
        %1061 = vmatpush2.msra.mxu0 0.0
        %1062 = vmatprep.subr.mxu0 0.0
        %1063 = vmatpush2.msra.mxu0 0.0
        %1064 = vmatprep.subr.mxu0 0.0
        %1065 = vmatpush2.msra.mxu0 0.0
        %1066 = vmatprep.subr.mxu0 0.0
        %1067 = vmatpush2.msra.mxu0 0.0
        %1068 = vmatprep.subr.mxu0 0.0
        %1069 = vmatpush2.msra.mxu0 0.0
        %1070 = vmatprep.subr.mxu0 0.0
        %1071 = vmatpush2.msra.mxu0 0.0
        %1072 = vmatprep.subr.mxu0 0.0
        %1073 = vmatpush2.msra.mxu0 0.0
        %1074 = vmatprep.mubr.f32.mxu0 0.0
        %1075 = vmatmul.mubr.f32.gmra.mxu0 %v1008
        %v1076 = vpop.f32.mrf.mxu0
        %v1077 = vadd.f32 0.0, %v1076
        %v1078 = vpop.f32.mrf.mxu0
        %1079 = vdwg.mxu0
        %vm1080 = vcmask 778240
        %1081 = vst.msk [vmem:[%s229] sm:$0x1] %vm1080, %v785
        %1082 = vst.msk [vmem:[%s229 + $0x1] sm:$0x1] %vm1080, %v858
        %1083 = vst.msk [vmem:[%s229 + $0x2] sm:$0x1] %vm1080, %v931
        %1084 = vst.msk [vmem:[%s229 + $0x3] sm:$0x1] %vm1080, %v1004
        %1085 = vst.msk [vmem:[%s229 + $0x4] sm:$0x1] %vm1080, %v1077
        %s1086 = sand.u32 %s104, 1
        %s1087 = scalar_lea.sflag [#allocation4], %s1086
        %s1088 = sand.u32 %s104, 1
        %s1089 = smul.addr %s1088, 5
        %s1090 = scalar_lea.vmem [#allocation7], %s1089
        // Predicated region
        $region41: #{tpu_custom_call.1} parent=31 // pred_check
          %p1091 = pneg %p114
        $region42: #{tpu_custom_call.1} parent=31 // pred_check_branch
          %1093 = sbr.rel (%p1091) target = $region44
        $region43: #{tpu_custom_call.1} parent=31 // pred_region
          %s1094 = smul.u32 5, %s23
          %s1096 = ssub.s32 80, 80
          %1097 = vsyncadd %s1087, %s1096
          %s1098 = smul.addr %s1094, 16
          %s1099 = scalar_lea.hbm %s3, %s1098
          %s1100 = sshll.u32 %s1090, 4
          %s1101 = int_to_ptr.vmem [resolvable:$true] %s1100
          %1106 = dma.vmem_to_hbm [thread:$0]  %s1101, 80, %s1099, %s1087, 16, 16, 1
        $region44: #{tpu_custom_call.1} parent=31 // pred_fallthru
          _
      $region32: #{tpu_custom_call.1} parent=5 // pred_fallthru
        _
      %p1107 = scmp.le.s32.totalorder 2, %s18
      // Predicated region
      $region45: #{tpu_custom_call.1} parent=5 // pred_check
        %p1108 = pneg %p1107
      $region46: #{tpu_custom_call.1} parent=5 // pred_check_branch
        %1110 = sbr.rel (%p1108) target = $region48
      $region47: #{tpu_custom_call.1} parent=5 // pred_region
        %s1111 = ssub.s32 %s18, 2
        // Predicated region
        $region49: #{tpu_custom_call.1} parent=47 // pred_check
          %p1112 = pneg %p120
        $region50: #{tpu_custom_call.1} parent=47 // pred_check_branch
          %1114 = sbr.rel (%p1112) target = $region52
        $region51: #{tpu_custom_call.1} parent=47 // pred_region
          %s1115 = sand.u32 %s105, 1
          %s1116 = scalar_lea.sflag [#allocation4], %s1115
          %s1117 = sand.u32 %s105, 1
          %s1118 = smul.addr %s1117, 5
          %s1119 = scalar_lea.vmem [#allocation7], %s1118
          %1120 = dma.done %s1116, 80
        $region52: #{tpu_custom_call.1} parent=47 // pred_fallthru
          _
      $region48: #{tpu_custom_call.1} parent=5 // pred_fallthru
        _
    $region6: #{tpu_custom_call.1} parent=1 // loop_footer
      %s22 = sadd.s32 1, %s18
    $region7: #{tpu_custom_call.1} parent=1 // loop_footer_branch
      %17 = sbr.rel target = $region3
    $region8: #{tpu_custom_call.1} parent=1 // loop_exit
      _
    %1121 = vsyncpa [#allocation3], 1
    %s1122 = scalar_lea.sflag [#allocation3], 1
    %1123 = vsyncpa %s1122, 1
    %1124 = vsyncpa [#allocation6], 1
    %s1125 = scalar_lea.sflag [#allocation6], 1
    %1126 = vsyncpa %s1125, 1
    %1127 = vsyncpa [#allocation4], 1
    %s1128 = scalar_lea.sflag [#allocation4], 1
    %1129 = vsyncpa %s1128, 1

</llo_original>
